<compile_context>
chip_gen: v7x
topology: tpu7x:2x2x1
jax: 0.10.0
libtpu: 0.0.40
codegen_flags: <defaults>
</compile_context>

<pallas_src>
import functools

import numpy as np

import jax
import jax.numpy as jnp
from jax.experimental import pallas as pl
from jax.experimental.pallas import tpu as pltpu


# ---------------------------------------------------------------------------
# Backward Pallas kernel:  dx = scale[:, None] * g    (scale = lambda_ * mask)
# ---------------------------------------------------------------------------
def _masked_scale_kernel(scale_ref, g_ref, dx_ref, *, tm, sub, slice_scale):
    # scale_ref: resident (N_pad, 1) column (slice_scale=True) or (tm, 1) block.
    # g_ref/dx_ref: (tm, tf)
    if slice_scale:
        row0 = pl.multiple_of(pl.program_id(0) * tm, sub)
        s = scale_ref[pl.ds(row0, tm), :]
    else:
        s = scale_ref[...]
    dx_ref[...] = s * g_ref[...]


_TILE_BUDGET_BYTES = 4 << 20          # ~4 MiB per (tm, tf) tile; ~4 live tiles
_RESIDENT_SCALE_MAX_ROWS = 4096       # lane-padded (rows,1) col stays <= ~2 MiB


def _sublane_multiple(itemsize):
    # Dtype-aware second-minor rounding: 8 (f32), 16 (bf16), 32 (int8/fp8).
    return {4: 8, 2: 16, 1: 32}.get(itemsize, 8)


def _pick_tiles(n, f, itemsize, budget_bytes=_TILE_BUDGET_BYTES):
    """Pick (tm, tf) so one tile is ~budget_bytes.

    With double-buffered g input + dx output (~4 live tiles) plus the resident
    scale column this stays under the 32 MiB vmem limit on every generation
    (incl. v7x's 64 MiB per-TC VMEM), while 1-4 MiB tiles amortize the
    ~0.35 us per-grid-step cost (measured ~85% of HBM roofline).
    """
    sub = _sublane_multiple(itemsize)
    # Feature (lane) tile: full width when an 8/16/32-row slab fits the budget,
    # otherwise a large multiple of 128 lanes.
    if f * itemsize * sub <= budget_bytes:
        tf = f
    else:
        tf = (budget_bytes // (sub * itemsize) // 128) * 128
        tf = max(128, min(tf, f))
    # Row (sublane) tile: byte budget alone decides (no artificial row cap).
    rows = budget_bytes // max(1, tf * itemsize)
    rows = max(sub, (rows // sub) * sub)
    tm = n if rows >= n else rows
    return tm, tf


def _masked_bwd_pallas(g, scale_col, *, tile_rows=None, tile_cols=None):
    """dx = scale_col * g via a tiled, double-buffered Pallas kernel.

    g: (N, F) with F >= 128.  scale_col: (N, 1), same dtype as g.
    """
    n, f = g.shape
    itemsize = g.dtype.itemsize
    sub = _sublane_multiple(itemsize)

    tm, tf = _pick_tiles(n, f, itemsize)
    if tile_rows is not None:                      # test/tuning override
        tr = max(sub, (int(tile_rows) // sub) * sub)
        tm = n if tr >= n else tr
    if tile_cols is not None:
        tc = max(128, (int(tile_cols) // 128) * 128)
        tf = f if tc >= f else tc

    n_row_tiles = pl.cdiv(n, tm)
    n_col_tiles = pl.cdiv(f, tf)
    grid = (n_row_tiles, n_col_tiles)

    # Pad the scale column to a whole number of row tiles so the in-kernel
    # pl.ds slice never runs out of bounds on the last (partial) row tile.
    n_pad = n_row_tiles * tm
    scale = scale_col
    if n_pad > n:
        scale = jnp.pad(scale, ((0, n_pad - n), (0, 0)))

    # Hoist the scale column out of the per-step pipeline when it is small
    # enough to live in VMEM once (the (rows,1) layout lane-pads to 128).
    resident = n_pad <= _RESIDENT_SCALE_MAX_ROWS
    slice_scale = resident and (n_row_tiles > 1)
    if resident:
        scale_spec = pl.BlockSpec((n_pad, 1), lambda i, j: (0, 0))
    else:
        scale_spec = pl.BlockSpec((tm, 1), lambda i, j: (i, 0))

    kernel = functools.partial(
        _masked_scale_kernel, tm=tm, sub=sub, slice_scale=slice_scale)

    return pl.pallas_call(
        kernel,
        out_shape=jax.ShapeDtypeStruct(g.shape, g.dtype),
        grid=grid,
        in_specs=[
            scale_spec,                                   # scale column
            pl.BlockSpec((tm, tf), lambda i, j: (i, j)),  # upstream grad
        ],
        out_specs=pl.BlockSpec((tm, tf), lambda i, j: (i, j)),
        input_output_aliases={1: 0},                      # dx reuses g's HBM buffer
        compiler_params=pltpu.CompilerParams(
            dimension_semantics=("parallel", "parallel"),  # independent tiles
            vmem_limit_bytes=32 << 20,
        ),
    )(scale, g)


def _masked_grl_bwd_impl(g, mask, lambda_):
    n, f = g.shape
    # Fold lambda_ into the mask column on the host.  Computed in f32 then cast
    # so lambda_ is not rounded at bf16 epsilon before the fold.
    scale = (mask.astype(jnp.float32) * jnp.float32(lambda_)).astype(g.dtype)
    scale = scale.reshape(n, 1)
    if f < 128:
        # Lane-sparse output would force masked vst.msk stores (worst on v5e's
        # single store slot); plain XLA fuses this at HBM roofline instead.
        return scale * g
    return _masked_bwd_pallas(g, scale)


# ---------------------------------------------------------------------------
# custom_vjp wiring: identity forward, masked/scaled backward
# ---------------------------------------------------------------------------
def _zero_cotangent(x):
    # Correctly-typed zero cotangent even when the mask is bool/int.
    if jnp.issubdtype(x.dtype, jnp.floating) or jnp.issubdtype(x.dtype, jnp.complexfloating):
        return jnp.zeros_like(x)
    return np.zeros(np.shape(x), dtype=jax.dtypes.float0)


@functools.partial(jax.custom_vjp, nondiff_argnums=(2,))
def masked_grad_reversal(x, mask, lambda_):
    # PyTorch forward is x.clone(); JAX arrays are immutable, so returning x
    # is identical and avoids any HBM round trip.
    return x


def _mgr_fwd(x, mask, lambda_):
    return x, (mask,)


def _mgr_bwd(lambda_, residuals, g):
    (mask,) = residuals
    dx = _masked_grl_bwd_impl(g, mask, lambda_)
    return dx, _zero_cotangent(mask)   # mask gets no gradient (None in PyTorch)


masked_grad_reversal.defvjp(_mgr_fwd, _mgr_bwd)


# ---------------------------------------------------------------------------
# Module-equivalent wrapper
# ---------------------------------------------------------------------------
class MaskedGradientReversal:
    """Mirror of the PyTorch module: forward(x) -> GRL applied to x[0]."""

    def __init__(self, mask, lambda_):
        self.mask_ = mask
        self.lambda_ = float(lambda_)

    def __call__(self, x):
        # PyTorch forward takes a tuple/list and only uses x[0].
        return masked_grad_reversal(x[0], self.mask_, self.lambda_)


# ---------------------------------------------------------------------------
# Demo / self-check
# ---------------------------------------------------------------------------
if __name__ == "__main__":
    key = jax.random.PRNGKey(0)
    k_x, k_m, k_g1, k_g2, k_g3 = jax.random.split(key, 5)

    lambda_ = 0.7

    # --- Module-level test: identity forward + masked backward (Pallas path) ---
    batch, hidden = 8, 128                       # F = 128 -> lane-dense kernel
    x = jax.random.normal(k_x, (batch, hidden), dtype=jnp.float32)
    mask = (jax.random.uniform(k_m, (batch,)) > 0.5).astype(jnp.float32)
    layer = MaskedGradientReversal(mask, lambda_)

    out = jax.block_until_ready(layer((x,)))
    assert out.shape == x.shape and out.dtype == x.dtype
    assert jnp.allclose(out, x)

    def loss(xx):
        return jnp.sum(layer((xx,)) * 2.0)

    gx = jax.block_until_ready(jax.grad(loss)(x))
    expected = mask[:, None] * lambda_ * jnp.full_like(x, 2.0)
    assert jnp.allclose(gx, expected, atol=1e-6)

    # --- Multi-tile 2-D grid (3 x 2 tiles), resident scale sliced in-kernel ----
    g2 = jax.random.normal(k_g1, (48, 256), dtype=jnp.float32)
    mask2 = (jnp.arange(48) % 2).astype(jnp.float32)
    scale2 = (mask2 * lambda_).reshape(-1, 1).astype(g2.dtype)
    dx2 = jax.block_until_ready(
        _masked_bwd_pallas(g2, scale2, tile_rows=16, tile_cols=128))
    assert jnp.allclose(dx2, scale2 * g2, atol=1e-6)

    # --- Partial last row tile (n not a multiple of tm) -------------------------
    g3 = jax.random.normal(k_g2, (20, 128), dtype=jnp.float32)
    mask3 = (jnp.arange(20) % 3 == 0).astype(jnp.float32)
    scale3 = (mask3 * lambda_).reshape(-1, 1).astype(g3.dtype)
    dx3 = jax.block_until_ready(_masked_bwd_pallas(g3, scale3, tile_rows=16))
    assert jnp.allclose(dx3, scale3 * g3, atol=1e-6)

    # --- bf16 grads: dtype-aware sublane rounding (tm multiple of 16) ----------
    g4 = jax.random.normal(k_g3, (64, 256), dtype=jnp.float32).astype(jnp.bfloat16)
    mask4 = (jnp.arange(64) % 2).astype(jnp.float32)
    scale4 = (mask4 * lambda_).astype(jnp.bfloat16).reshape(-1, 1)
    dx4 = jax.block_until_ready(_masked_bwd_pallas(g4, scale4, tile_rows=32))
    ref4 = (scale4.astype(jnp.float32) * g4.astype(jnp.float32))
    assert jnp.allclose(dx4.astype(jnp.float32), ref4, atol=5e-2)

    # --- F < 128 fallback path (plain fused XLA multiply) -----------------------
    g5 = jax.random.normal(k_x, (8, 32), dtype=jnp.float32)
    mask5 = (jnp.arange(8) % 2).astype(jnp.float32)
    dx5 = jax.block_until_ready(_masked_grl_bwd_impl(g5, mask5, lambda_))
    assert jnp.allclose(dx5, mask5[:, None] * lambda_ * g5, atol=1e-6)

    print("KERNEL_OK")
</pallas_src>

<mosaic_0001>
module attributes {stable_mosaic.version = 11 : i64} {
  func.func @_masked_scale_kernel(%arg0: i32, %arg1: i32, %arg2: memref<8x1xf32, #tpu.memory_space<vmem>>, %arg3: memref<8x128xf32, #tpu.memory_space<vmem>>, %arg4: memref<8x128xf32, #tpu.memory_space<vmem>>) attributes {dimension_semantics = [#tpu.dimension_semantics<parallel>, #tpu.dimension_semantics<parallel>], iteration_bounds = array<i64: 1, 1>, scalar_prefetch = 0 : i64, scratch_operands = 0 : i64, tpu.core_type = #tpu.core_type<tc>, window_params = [{pipeline_mode = #tpu.pipeline_mode<synchronous>, transform_indices = @transform_0, window_bounds = array<i64: 8, 1>}, {transform_indices = @transform_1, window_bounds = array<i64: 8, 128>}, {transform_indices = @transform_2, window_bounds = array<i64: 8, 128>}]} {
    %c0 = arith.constant 0 : index
    %c0_0 = arith.constant 0 : index
    %0 = vector.load %arg2[%c0, %c0_0] : memref<8x1xf32, #tpu.memory_space<vmem>>, vector<8x1xf32>
    %c0_1 = arith.constant 0 : index
    %c0_2 = arith.constant 0 : index
    %1 = vector.load %arg3[%c0_1, %c0_2] : memref<8x128xf32, #tpu.memory_space<vmem>>, vector<8x128xf32>
    %2 = vector.broadcast %0 : vector<8x1xf32> to vector<8x128xf32>
    %3 = arith.mulf %2, %1 : vector<8x128xf32>
    %c0_3 = arith.constant 0 : index
    %c0_4 = arith.constant 0 : index
    %4 = vector.load %arg4[%c0_3, %c0_4] : memref<8x128xf32, #tpu.memory_space<vmem>>, vector<8x128xf32>
    tpu.vector_store %arg4[%c0_3, %c0_4], %3 {strides = array<i32>} : memref<8x128xf32, #tpu.memory_space<vmem>>, vector<8x128xf32>,
    return
  }
  func.func @transform_0(%arg0: i32, %arg1: i32) -> (i32, i32) {
    %c0_i32 = arith.constant 0 : i32
    %c0_i32_0 = arith.constant 0 : i32
    %c0_i32_1 = arith.constant 0 : i32
    return %c0_i32, %c0_i32_0 : i32, i32
  }
  func.func @transform_1(%arg0: i32, %arg1: i32) -> (i32, i32) {
    %c0_i32 = arith.constant 0 : i32
    return %arg0, %arg1 : i32, i32
  }
  func.func @transform_2(%arg0: i32, %arg1: i32) -> (i32, i32) {
    %c0_i32 = arith.constant 0 : i32
    return %arg0, %arg1 : i32, i32
  }
}

</mosaic_0001>

<llo_original>
// kernel: tpu_custom_call.1
$region0: #{tpu_custom_call.1}
  #allocation0 [shape = 'u32[]', space=smem, size = 0x4, offset = 0x4, fixed_abs, tag = 'smem constant byte address 0x4 - core index']
  #allocation1 [shape = 'u32[144,128]{1,0:T(1,128)}', space=vmem, size = 0x12000, scoped, tag = 'internal scratch']
  %s0 = inlined_call_operand.vmem [shape: f32[8,1], index: 0, kind: input, shape index: {}]
  %s1 = inlined_call_operand.hbm [shape: f32[8,128], index: 1, kind: input, shape index: {}, may-alias: {1,2}]
  %s2 = inlined_call_operand.hbm [shape: f32[8,128], index: 2, kind: output, shape index: {}, may-alias: {1,2}]
  %s3 = sld [smem:[#allocation0]]
  $region22: #{tpu_custom_call.1} parent=0
    _
  %s5 = ssub.s32 1, %s3
  %s6 = scalar_select 0, %s5, %s3
  $region1: #{tpu_custom_call.1} parent=0
    #allocation2 [shape = 'u8[4096]{0}', space=vmem, size = 0x1000, scoped, tag = 'input window, operand 1, single buffered']
    #allocation3 [shape = 's32[1]{0}', space=sflag, size = 0x4, scoped, tag = 'scoped memory for tpu_custom_call.1']
    #allocation4 [shape = 's32[1]{0}', space=sflag, size = 0x4, scoped, tag = 'scoped memory for tpu_custom_call.1']
    #allocation5 [shape = 'u8[4096]{0}', space=vmem, size = 0x1000, scoped, tag = 'output window, operand 0, single buffered']
    %7 = vsyncpa [#allocation3], 0
    %8 = vsyncpa [#allocation4], 0
    // Predicated region
    $region2: #{tpu_custom_call.1} parent=1 // pred_check
      _
    $region3: #{tpu_custom_call.1} parent=1 // pred_check_branch
      %10 = sbr.rel (0) target = $region5
    $region4: #{tpu_custom_call.1} parent=1 // pred_region
      _
    $region5: #{tpu_custom_call.1} parent=1 // pred_fallthru
      _
    // Predicated region
    $region6: #{tpu_custom_call.1} parent=1 // pred_check
      _
    $region7: #{tpu_custom_call.1} parent=1 // pred_check_branch
      %12 = sbr.rel (0) target = $region9
    $region8: #{tpu_custom_call.1} parent=1 // pred_region
      %s14 = ssub.s32 128, 128
      %15 = vsyncadd [#allocation3], %s14
      %s17 = sshll.u32 [#allocation2], 4
      %s18 = int_to_ptr.vmem [resolvable:$true] %s17
      %20 = dma.hbm_to_vmem [thread:$0]  %s1, 128, %s18, [#allocation3]
    $region9: #{tpu_custom_call.1} parent=1 // pred_fallthru
      _
    // Predicated region
    $region10: #{tpu_custom_call.1} parent=1 // pred_check
      _
    $region11: #{tpu_custom_call.1} parent=1 // pred_check_branch
      %22 = sbr.rel (0) target = $region13
    $region12: #{tpu_custom_call.1} parent=1 // pred_region
      %23 = dma.done [#allocation3], 128
    $region13: #{tpu_custom_call.1} parent=1 // pred_fallthru
      _
    %v24 = vld [vmem:[%s0] sm:$0xff]
    %v25 = vld [vmem:[#allocation2] sm:$0xff]
    %27 = vset.pattern.permute.xlu0 0
    %28 = vperm.xlu0 %27, %v24
    %v29 = vpop.permute.xlu0 %28
    %v31 = vmul.f32 %v29, %v25
    %32 = vst [vmem:[#allocation5] sm:$0xff] %v31
    // Predicated region
    $region14: #{tpu_custom_call.1} parent=1 // pred_check
      _
    $region15: #{tpu_custom_call.1} parent=1 // pred_check_branch
      %34 = sbr.rel (0) target = $region17
    $region16: #{tpu_custom_call.1} parent=1 // pred_region
      %s36 = ssub.s32 128, 128
      %37 = vsyncadd [#allocation4], %s36
      %s39 = sshll.u32 [#allocation5], 4
      %s40 = int_to_ptr.vmem [resolvable:$true] %s39
      %42 = dma.vmem_to_hbm [thread:$0]  %s40, 128, %s2, [#allocation4]
    $region17: #{tpu_custom_call.1} parent=1 // pred_fallthru
      _
    // Predicated region
    $region18: #{tpu_custom_call.1} parent=1 // pred_check
      _
    $region19: #{tpu_custom_call.1} parent=1 // pred_check_branch
      %44 = sbr.rel (0) target = $region21
    $region20: #{tpu_custom_call.1} parent=1 // pred_region
      %45 = dma.done [#allocation4], 128
    $region21: #{tpu_custom_call.1} parent=1 // pred_fallthru
      _
    %46 = vsyncpa [#allocation3], 1
    %47 = vsyncpa [#allocation4], 1

</llo_original>
